<compile_context>
chip_gen: v5e
topology: v5e:2x2
jax: 0.10.0
libtpu: 0.0.40
codegen_flags: <defaults>
</compile_context>

<pallas_src>
import jax
import jax.numpy as jnp
from jax.experimental import pallas as pl
from jax.experimental.pallas import tpu as pltpu


def _sigmoid(z):
    return 1.0 / (1.0 + jnp.exp(-z))


# ----------------------------------------------------------------------------
# Fused SP_Block kernel: one batch element per grid step, spatial flattened.
# ----------------------------------------------------------------------------
def _sp_block_kernel(x_ref, w1_ref, wh_ref, ww_ref,
                     ph_ref, pw_ref, eh_ref, ew_ref, o_ref):
    # x_ref : (1, C, H*W)  input feature map, NCHW with spatial flattened
    # w1_ref: (Cr, C)      conv_1x1 weight (C -> C/r, no bias)
    # wh_ref: (C, Cr)      F_h weight      (C/r -> C, no bias)
    # ww_ref: (C, Cr)      F_w weight      (C/r -> C, no bias)
    # ph_ref: (H*W, H)     pooling matrix: mean over W
    # pw_ref: (H*W, W)     pooling matrix: mean over H
    # eh_ref: (H, H*W)     expansion matrix: (C,H) -> (C,H*W)
    # ew_ref: (W, H*W)     expansion matrix: (C,W) -> (C,H*W)
    # o_ref : (1, C, H*W)
    x = x_ref[0]                                                    # (C, HW)

    # Adaptive average pools (h==H, w==W): lane-dense MXU matmuls instead of
    # cross-lane reductions.
    x_h = jnp.dot(x, ph_ref[...], preferred_element_type=jnp.float32)  # (C, H)
    x_w = jnp.dot(x, pw_ref[...], preferred_element_type=jnp.float32)  # (C, W)

    # conv_1x1 + ReLU, applied separately to the two halves of the spatial
    # concat (identical math, avoids concat/split relayouts).
    w1 = w1_ref[...]                                                # (Cr, C)
    y_h = jnp.maximum(
        jnp.dot(w1, x_h, preferred_element_type=jnp.float32), 0.0)  # (Cr, H)
    y_w = jnp.maximum(
        jnp.dot(w1, x_w, preferred_element_type=jnp.float32), 0.0)  # (Cr, W)

    # F_h / F_w 1x1 convs + sigmoid gates.
    s_h = _sigmoid(
        jnp.dot(wh_ref[...], y_h, preferred_element_type=jnp.float32))  # (C, H)
    s_w = _sigmoid(
        jnp.dot(ww_ref[...], y_w, preferred_element_type=jnp.float32))  # (C, W)

    # Broadcast the per-row / per-column gates back to the lane-dense (C, HW)
    # layout via the MXU, then fuse gating + residual:
    #   out = x * s_h * s_w + x = x * (s_h * s_w + 1)
    g_h = jnp.dot(s_h, eh_ref[...], preferred_element_type=jnp.float32)  # (C, HW)
    g_w = jnp.dot(s_w, ew_ref[...], preferred_element_type=jnp.float32)  # (C, HW)
    o_ref[0] = (x * (g_h * g_w + 1.0)).astype(o_ref.dtype)


def sp_block_forward(x, w1, wh, ww, h=None, w=None):
    """SP_Block forward.  x: (N, C, H, W) f32.  Weights are 2-D 1x1-conv mats."""
    N, C, H, W = x.shape
    Cr = w1.shape[0]
    if h is None:
        h = H
    if w is None:
        w = W
    # SP_Block's broadcasting (expand_as) only makes sense when h==H, w==W.
    assert h == H and w == W, "SP_Block requires h == x.shape[2], w == x.shape[3]"
    assert w1.shape == (Cr, C) and wh.shape == (C, Cr) and ww.shape == (C, Cr)

    HW = H * W
    x = x.astype(jnp.float32).reshape(N, C, HW)   # free reshape (contiguous)

    # Constant pooling / expansion matrices (built once; tiny).
    h_idx = jnp.arange(HW, dtype=jnp.int32) // W          # row index per lane
    w_idx = jnp.arange(HW, dtype=jnp.int32) % W           # col index per lane
    ph = (h_idx[:, None] == jnp.arange(H)[None, :]).astype(jnp.float32) / W  # (HW, H)
    pw = (w_idx[:, None] == jnp.arange(W)[None, :]).astype(jnp.float32) / H  # (HW, W)
    eh = (jnp.arange(H)[:, None] == h_idx[None, :]).astype(jnp.float32)      # (H, HW)
    ew = (jnp.arange(W)[:, None] == w_idx[None, :]).astype(jnp.float32)      # (W, HW)

    out = pl.pallas_call(
        _sp_block_kernel,
        out_shape=jax.ShapeDtypeStruct((N, C, HW), jnp.float32),
        grid_spec=pltpu.PrefetchScalarGridSpec(
            num_scalar_prefetch=0,
            grid=(N,),
            in_specs=[
                pl.BlockSpec((1, C, HW), lambda n: (n, 0, 0)),
                pl.BlockSpec((Cr, C), lambda n: (0, 0)),
                pl.BlockSpec((C, Cr), lambda n: (0, 0)),
                pl.BlockSpec((C, Cr), lambda n: (0, 0)),
                pl.BlockSpec((HW, H), lambda n: (0, 0)),
                pl.BlockSpec((HW, W), lambda n: (0, 0)),
                pl.BlockSpec((H, HW), lambda n: (0, 0)),
                pl.BlockSpec((W, HW), lambda n: (0, 0)),
            ],
            out_specs=pl.BlockSpec((1, C, HW), lambda n: (n, 0, 0)),
        ),
        compiler_params=pltpu.CompilerParams(
            dimension_semantics=("parallel",),
            vmem_limit_bytes=64 * 1024 * 1024,
        ),
    )(x, w1.astype(jnp.float32), wh.astype(jnp.float32), ww.astype(jnp.float32),
      ph, pw, eh, ew)
    return out.reshape(N, C, H, W)


# ----------------------------------------------------------------------------
# Pure-JAX reference mirroring the PyTorch forward (for numerical check).
# ----------------------------------------------------------------------------
def sp_block_ref(x, w1, wh, ww):
    N, C, H, W = x.shape
    x_h = jnp.mean(x, axis=3, keepdims=True)                    # (N,C,H,1)
    x_h = jnp.transpose(x_h, (0, 1, 3, 2))                      # (N,C,1,H)
    x_w = jnp.mean(x, axis=2, keepdims=True)                    # (N,C,1,W)
    cat = jnp.concatenate([x_h, x_w], axis=3)                   # (N,C,1,H+W)
    y = jnp.einsum("rc,ncst->nrst", w1, cat)                    # conv_1x1
    y = jnp.maximum(y, 0.0)                                     # ReLU
    y_h, y_w = y[..., :H], y[..., H:]                           # split
    y_h = jnp.transpose(y_h, (0, 1, 3, 2))                      # (N,Cr,H,1)
    s_h = jax.nn.sigmoid(jnp.einsum("cr,nrst->ncst", wh, y_h))  # (N,C,H,1)
    s_w = jax.nn.sigmoid(jnp.einsum("cr,nrst->ncst", ww, y_w))  # (N,C,1,W)
    return x * s_h * s_w + x


# ----------------------------------------------------------------------------
# main
# ----------------------------------------------------------------------------
if __name__ == "__main__":
    key = jax.random.PRNGKey(0)
    k1, k2, k3, k4 = jax.random.split(key, 4)

    # SP_Block(channel=16, h=16, w=16, reduction=4)
    N, C, H, W = 2, 16, 16, 16
    reduction = 4
    Cr = C // reduction

    x = jax.random.normal(k1, (N, C, H, W), dtype=jnp.float32)
    # 1x1 conv weights (bias=False), stored as 2-D matrices.
    w1 = 0.3 * jax.random.normal(k2, (Cr, C), dtype=jnp.float32)   # conv_1x1
    wh = 0.3 * jax.random.normal(k3, (C, Cr), dtype=jnp.float32)   # F_h
    ww = 0.3 * jax.random.normal(k4, (C, Cr), dtype=jnp.float32)   # F_w

    out = jax.block_until_ready(sp_block_forward(x, w1, wh, ww, h=H, w=W))
    ref = jax.block_until_ready(sp_block_ref(x, w1, wh, ww))

    assert out.shape == (N, C, H, W), out.shape
    assert jnp.allclose(out, ref, atol=1e-4, rtol=1e-4), (
        float(jnp.max(jnp.abs(out - ref))))

    print("KERNEL_OK")
</pallas_src>

<mosaic_0001>
module attributes {stable_mosaic.version = 11 : i64} {
  func.func @_sp_block_kernel(%arg0: i32, %arg1: memref<1x16x256xf32, #tpu.memory_space<vmem>>, %arg2: memref<4x16xf32, #tpu.memory_space<vmem>>, %arg3: memref<16x4xf32, #tpu.memory_space<vmem>>, %arg4: memref<16x4xf32, #tpu.memory_space<vmem>>, %arg5: memref<256x16xf32, #tpu.memory_space<vmem>>, %arg6: memref<256x16xf32, #tpu.memory_space<vmem>>, %arg7: memref<16x256xf32, #tpu.memory_space<vmem>>, %arg8: memref<16x256xf32, #tpu.memory_space<vmem>>, %arg9: memref<1x16x256xf32, #tpu.memory_space<vmem>>) attributes {dimension_semantics = [#tpu.dimension_semantics<parallel>], iteration_bounds = array<i64: 2>, scalar_prefetch = 0 : i64, scratch_operands = 0 : i64, tpu.core_type = #tpu.core_type<tc>, window_params = [{transform_indices = @transform_0, window_bounds = array<i64: 1, 16, 256>}, {pipeline_mode = #tpu.pipeline_mode<synchronous>, transform_indices = @transform_1, window_bounds = array<i64: 4, 16>}, {pipeline_mode = #tpu.pipeline_mode<synchronous>, transform_indices = @transform_2, window_bounds = array<i64: 16, 4>}, {pipeline_mode = #tpu.pipeline_mode<synchronous>, transform_indices = @transform_3, window_bounds = array<i64: 16, 4>}, {pipeline_mode = #tpu.pipeline_mode<synchronous>, transform_indices = @transform_4, window_bounds = array<i64: 256, 16>}, {pipeline_mode = #tpu.pipeline_mode<synchronous>, transform_indices = @transform_5, window_bounds = array<i64: 256, 16>}, {pipeline_mode = #tpu.pipeline_mode<synchronous>, transform_indices = @transform_6, window_bounds = array<i64: 16, 256>}, {pipeline_mode = #tpu.pipeline_mode<synchronous>, transform_indices = @transform_7, window_bounds = array<i64: 16, 256>}, {transform_indices = @transform_8, window_bounds = array<i64: 1, 16, 256>}]} {
    %c0 = arith.constant 0 : index
    %c0_0 = arith.constant 0 : index
    %c0_1 = arith.constant 0 : index
    %0 = vector.load %arg1[%c0, %c0_0, %c0_1] : memref<1x16x256xf32, #tpu.memory_space<vmem>>, vector<1x16x256xf32>
    %1 = vector.shape_cast %0 : vector<1x16x256xf32> to vector<16x256xf32>
    %c0_2 = arith.constant 0 : index
    %c0_3 = arith.constant 0 : index
    %2 = vector.load %arg5[%c0_2, %c0_3] : memref<256x16xf32, #tpu.memory_space<vmem>>, vector<256x16xf32>
    %cst = arith.constant dense<0.000000e+00> : vector<16x16xf32>
    %3 = tpu.matmul %1, %2, %cst {dimension_numbers = #tpu.dot_dimension_numbers<[1], [0], [0], [1], [0, 0, 1, 1], [], []>} : vector<16x256xf32>, vector<256x16xf32>, vector<16x16xf32> -> vector<16x16xf32>
    %c0_4 = arith.constant 0 : index
    %c0_5 = arith.constant 0 : index
    %4 = vector.load %arg6[%c0_4, %c0_5] : memref<256x16xf32, #tpu.memory_space<vmem>>, vector<256x16xf32>
    %cst_6 = arith.constant dense<0.000000e+00> : vector<16x16xf32>
    %5 = tpu.matmul %1, %4, %cst_6 {dimension_numbers = #tpu.dot_dimension_numbers<[1], [0], [0], [1], [0, 0, 1, 1], [], []>} : vector<16x256xf32>, vector<256x16xf32>, vector<16x16xf32> -> vector<16x16xf32>
    %c0_7 = arith.constant 0 : index
    %c0_8 = arith.constant 0 : index
    %6 = vector.load %arg2[%c0_7, %c0_8] : memref<4x16xf32, #tpu.memory_space<vmem>>, vector<4x16xf32>
    %cst_9 = arith.constant dense<0.000000e+00> : vector<4x16xf32>
    %7 = tpu.matmul %6, %3, %cst_9 {dimension_numbers = #tpu.dot_dimension_numbers<[1], [0], [0], [1], [0, 0, 1, 1], [], []>} : vector<4x16xf32>, vector<16x16xf32>, vector<4x16xf32> -> vector<4x16xf32>
    %cst_10 = arith.constant 0.000000e+00 : f32
    %8 = vector.broadcast %cst_10 : f32 to vector<4x16xf32>
    %9 = arith.maximumf %7, %8 : vector<4x16xf32>
    %cst_11 = arith.constant dense<0.000000e+00> : vector<4x16xf32>
    %10 = tpu.matmul %6, %5, %cst_11 {dimension_numbers = #tpu.dot_dimension_numbers<[1], [0], [0], [1], [0, 0, 1, 1], [], []>} : vector<4x16xf32>, vector<16x16xf32>, vector<4x16xf32> -> vector<4x16xf32>
    %cst_12 = arith.constant 0.000000e+00 : f32
    %11 = vector.broadcast %cst_12 : f32 to vector<4x16xf32>
    %12 = arith.maximumf %10, %11 : vector<4x16xf32>
    %c0_13 = arith.constant 0 : index
    %c0_14 = arith.constant 0 : index
    %13 = vector.load %arg3[%c0_13, %c0_14] : memref<16x4xf32, #tpu.memory_space<vmem>>, vector<16x4xf32>
    %cst_15 = arith.constant dense<0.000000e+00> : vector<16x16xf32>
    %14 = tpu.matmul %13, %9, %cst_15 {dimension_numbers = #tpu.dot_dimension_numbers<[1], [0], [0], [1], [0, 0, 1, 1], [], []>} : vector<16x4xf32>, vector<4x16xf32>, vector<16x16xf32> -> vector<16x16xf32>
    %cst_16 = arith.constant 0.000000e+00 : f32
    %15 = vector.broadcast %cst_16 : f32 to vector<16x16xf32>
    %16 = arith.subf %15, %14 : vector<16x16xf32>
    %17 = math.exp %16 : vector<16x16xf32>
    %cst_17 = arith.constant 1.000000e+00 : f32
    %18 = vector.broadcast %cst_17 : f32 to vector<16x16xf32>
    %19 = arith.addf %18, %17 : vector<16x16xf32>
    %cst_18 = arith.constant 1.000000e+00 : f32
    %20 = vector.broadcast %cst_18 : f32 to vector<16x16xf32>
    %21 = arith.divf %20, %19 : vector<16x16xf32>
    %c0_19 = arith.constant 0 : index
    %c0_20 = arith.constant 0 : index
    %22 = vector.load %arg4[%c0_19, %c0_20] : memref<16x4xf32, #tpu.memory_space<vmem>>, vector<16x4xf32>
    %cst_21 = arith.constant dense<0.000000e+00> : vector<16x16xf32>
    %23 = tpu.matmul %22, %12, %cst_21 {dimension_numbers = #tpu.dot_dimension_numbers<[1], [0], [0], [1], [0, 0, 1, 1], [], []>} : vector<16x4xf32>, vector<4x16xf32>, vector<16x16xf32> -> vector<16x16xf32>
    %cst_22 = arith.constant 0.000000e+00 : f32
    %24 = vector.broadcast %cst_22 : f32 to vector<16x16xf32>
    %25 = arith.subf %24, %23 : vector<16x16xf32>
    %26 = math.exp %25 : vector<16x16xf32>
    %cst_23 = arith.constant 1.000000e+00 : f32
    %27 = vector.broadcast %cst_23 : f32 to vector<16x16xf32>
    %28 = arith.addf %27, %26 : vector<16x16xf32>
    %cst_24 = arith.constant 1.000000e+00 : f32
    %29 = vector.broadcast %cst_24 : f32 to vector<16x16xf32>
    %30 = arith.divf %29, %28 : vector<16x16xf32>
    %c0_25 = arith.constant 0 : index
    %c0_26 = arith.constant 0 : index
    %31 = vector.load %arg7[%c0_25, %c0_26] : memref<16x256xf32, #tpu.memory_space<vmem>>, vector<16x256xf32>
    %cst_27 = arith.constant dense<0.000000e+00> : vector<16x256xf32>
    %32 = tpu.matmul %21, %31, %cst_27 {dimension_numbers = #tpu.dot_dimension_numbers<[1], [0], [0], [1], [0, 0, 1, 1], [], []>} : vector<16x16xf32>, vector<16x256xf32>, vector<16x256xf32> -> vector<16x256xf32>
    %c0_28 = arith.constant 0 : index
    %c0_29 = arith.constant 0 : index
    %33 = vector.load %arg8[%c0_28, %c0_29] : memref<16x256xf32, #tpu.memory_space<vmem>>, vector<16x256xf32>
    %cst_30 = arith.constant dense<0.000000e+00> : vector<16x256xf32>
    %34 = tpu.matmul %30, %33, %cst_30 {dimension_numbers = #tpu.dot_dimension_numbers<[1], [0], [0], [1], [0, 0, 1, 1], [], []>} : vector<16x16xf32>, vector<16x256xf32>, vector<16x256xf32> -> vector<16x256xf32>
    %35 = arith.mulf %32, %34 : vector<16x256xf32>
    %cst_31 = arith.constant 1.000000e+00 : f32
    %36 = vector.broadcast %cst_31 : f32 to vector<16x256xf32>
    %37 = arith.addf %35, %36 : vector<16x256xf32>
    %38 = arith.mulf %1, %37 : vector<16x256xf32>
    %c0_32 = arith.constant 0 : index
    %c0_33 = arith.constant 0 : index
    %c0_34 = arith.constant 0 : index
    %39 = vector.load %arg9[%c0_32, %c0_33, %c0_34] : memref<1x16x256xf32, #tpu.memory_space<vmem>>, vector<1x16x256xf32>
    %40 = vector.shape_cast %39 : vector<1x16x256xf32> to vector<16x256xf32>
    %41 = vector.shape_cast %38 : vector<16x256xf32> to vector<1x16x256xf32>
    tpu.vector_store %arg9[%c0_32, %c0_33, %c0_34], %41 {strides = array<i32>} : memref<1x16x256xf32, #tpu.memory_space<vmem>>, vector<1x16x256xf32>,
    return
  }
  func.func @transform_0(%arg0: i32) -> (i32, i32, i32) {
    %c0_i32 = arith.constant 0 : i32
    %c0_i32_0 = arith.constant 0 : i32
    %c0_i32_1 = arith.constant 0 : i32
    return %arg0, %c0_i32, %c0_i32_0 : i32, i32, i32
  }
  func.func @transform_1(%arg0: i32) -> (i32, i32) {
    %c0_i32 = arith.constant 0 : i32
    %c0_i32_0 = arith.constant 0 : i32
    %c0_i32_1 = arith.constant 0 : i32
    return %c0_i32, %c0_i32_0 : i32, i32
  }
  func.func @transform_2(%arg0: i32) -> (i32, i32) {
    %c0_i32 = arith.constant 0 : i32
    %c0_i32_0 = arith.constant 0 : i32
    %c0_i32_1 = arith.constant 0 : i32
    return %c0_i32, %c0_i32_0 : i32, i32
  }
  func.func @transform_3(%arg0: i32) -> (i32, i32) {
    %c0_i32 = arith.constant 0 : i32
    %c0_i32_0 = arith.constant 0 : i32
    %c0_i32_1 = arith.constant 0 : i32
    return %c0_i32, %c0_i32_0 : i32, i32
  }
  func.func @transform_4(%arg0: i32) -> (i32, i32) {
    %c0_i32 = arith.constant 0 : i32
    %c0_i32_0 = arith.constant 0 : i32
    %c0_i32_1 = arith.constant 0 : i32
    return %c0_i32, %c0_i32_0 : i32, i32
  }
  func.func @transform_5(%arg0: i32) -> (i32, i32) {
    %c0_i32 = arith.constant 0 : i32
    %c0_i32_0 = arith.constant 0 : i32
    %c0_i32_1 = arith.constant 0 : i32
    return %c0_i32, %c0_i32_0 : i32, i32
  }
  func.func @transform_6(%arg0: i32) -> (i32, i32) {
    %c0_i32 = arith.constant 0 : i32
    %c0_i32_0 = arith.constant 0 : i32
    %c0_i32_1 = arith.constant 0 : i32
    return %c0_i32, %c0_i32_0 : i32, i32
  }
  func.func @transform_7(%arg0: i32) -> (i32, i32) {
    %c0_i32 = arith.constant 0 : i32
    %c0_i32_0 = arith.constant 0 : i32
    %c0_i32_1 = arith.constant 0 : i32
    return %c0_i32, %c0_i32_0 : i32, i32
  }
  func.func @transform_8(%arg0: i32) -> (i32, i32, i32) {
    %c0_i32 = arith.constant 0 : i32
    %c0_i32_0 = arith.constant 0 : i32
    %c0_i32_1 = arith.constant 0 : i32
    return %arg0, %c0_i32, %c0_i32_0 : i32, i32, i32
  }
}

</mosaic_0001>

<llo_original>
// kernel: tpu_custom_call.1
$region0: #{tpu_custom_call.1}
  #allocation0 [shape = 'u32[]', space=smem, size = 0x4, offset = 0x4, fixed_abs, tag = 'smem constant byte address 0x4 - core index']
  #allocation1 [shape = 'u32[72,128]{1,0:T(1,128)}', space=vmem, size = 0x9000, scoped, tag = 'internal scratch']
  %s0 = inlined_call_operand.vmem [shape: f32[2,16,256], index: 0, kind: input, shape index: {}]
  %s1 = inlined_call_operand.vmem [shape: f32[4,16], index: 1, kind: input, shape index: {}]
  %s2 = inlined_call_operand.vmem [shape: f32[16,4], index: 2, kind: input, shape index: {}]
  %s3 = inlined_call_operand.vmem [shape: f32[16,4], index: 3, kind: input, shape index: {}]
  %s4 = inlined_call_operand.vmem [shape: f32[256,16], index: 4, kind: input, shape index: {}]
  %s5 = inlined_call_operand.vmem [shape: f32[256,16], index: 5, kind: input, shape index: {}]
  %s6 = inlined_call_operand.vmem [shape: f32[16,256], index: 6, kind: input, shape index: {}]
  %s7 = inlined_call_operand.vmem [shape: f32[16,256], index: 7, kind: input, shape index: {}]
  %s8 = inlined_call_operand.hbm [shape: f32[2,16,256], index: 8, kind: output, shape index: {}]
  %s9 = sld [smem:[#allocation0]]
  $region65: #{tpu_custom_call.1} parent=0
    _
  %s11 = ssub.s32 1, %s9
  %s12 = scalar_select 0, %s11, %s9
  $region1: #{tpu_custom_call.1} parent=0
    #allocation2 [shape = 'u8[32768]{0}', space=vmem, size = 0x8000, scoped, tag = 'output window, operand 0']
    #allocation3 [shape = 's32[2]{0}', space=sflag, size = 0x8, scoped, tag = 'scoped memory for tpu_custom_call.1']
    %13 = vsyncpa [#allocation3], 0
    %s14 = scalar_lea.sflag [#allocation3], 1
    %15 = vsyncpa %s14, 0
    loop: start=0, step=1, limit=4
    $region2: #{tpu_custom_call.1} parent=1 // loop_pre_header
      _
    $region3: #{tpu_custom_call.1} parent=1 // loop_header
      %s17 = sphi 0, %s21
      %p18 = scmp.ge.s32.totalorder %s17, 4
      %s27 = sphi 0, %s29
      %s30 = sphi 0, %s27
      %s31 = sphi 0, %s30
      %s47 = sphi 0, %s31
      %s51 = sphi 0, %s51
      %s53 = sphi 0, %s51
      %s54 = sphi 0, %s53
      %s68 = sphi 0, %s54
      %s72 = sphi 0, %s72
      %s74 = sphi 0, %s72
      %s75 = sphi 0, %s74
      %s89 = sphi 0, %s75
      %s93 = sphi 0, %s93
      %s95 = sphi 0, %s93
      %s96 = sphi 0, %s95
      %s110 = sphi 0, %s96
      %s114 = sphi 0, %s114
      %s116 = sphi 0, %s114
      %s117 = sphi 0, %s116
      %s131 = sphi 0, %s117
      %s135 = sphi 0, %s135
      %s137 = sphi 0, %s135
      %s138 = sphi 0, %s137
      %s152 = sphi 0, %s138
      %s156 = sphi 0, %s156
      %s158 = sphi 0, %s156
      %s159 = sphi 0, %s158
      %s173 = sphi 0, %s159
      %s177 = sphi 0, %s177
      %s179 = sphi 0, %s177
      %s180 = sphi 0, %s179
      %s194 = sphi 0, %s180
      %s200 = sphi 0, %s202
      %s203 = sphi 0, %s200
      %s204 = sphi 0, %s203
      %s220 = sphi 0, %s204
    $region4: #{tpu_custom_call.1} parent=1 // loop_header_branch
      %20 = sbr.rel (%p18) target = $region8
    $region5: #{tpu_custom_call.1} parent=1 // loop_body
      %s22 = ssub.s32 %s17, 1
      %s23 = ssub.s32 %s17, 2
      %s24 = sadd.s32 %s17, 1
      %s25 = ssub.s32 %s17, %s24
      %p26 = scmp.eq.s32.totalorder %s25, 0
      %s28 = sadd.s32 %s27, 1
      %s29 = scalar_select %p26, %s27, %s28
      %p32 = pneg %p26
      %p33 = scmp.eq.s32.totalorder %s17, 1
      %p34 = por %p32, %p33
      %p35 = scmp.ne.s32.totalorder %s27, %s30
      %p36 = scmp.eq.s32.totalorder %s17, 0
      %p37 = por %p35, %p36
      %p38 = scmp.ne.s32.totalorder %s27, %s30
      %p39 = scmp.eq.s32.totalorder %s22, 1
      %p40 = por %p38, %p39
      %p41 = scmp.ne.s32.totalorder %s30, %s31
      %p42 = scmp.eq.s32.totalorder %s22, 0
      %p43 = por %p41, %p42
      %p44 = scmp.ne.s32.totalorder %s30, %s31
      %p45 = scmp.eq.s32.totalorder %s23, 1
      %p46 = por %p44, %p45
      %p48 = scmp.ne.s32.totalorder %s31, %s47
      %p49 = scmp.eq.s32.totalorder %s23, 0
      %p50 = por %p48, %p49
      %s52 = sadd.s32 %s51, 1
      %p55 = scmp.eq.s32.totalorder %s17, 1
      %p56 = scmp.ne.s32.totalorder %s51, %s53
      %p57 = scmp.eq.s32.totalorder %s17, 0
      %p58 = por %p56, %p57
      %p59 = scmp.ne.s32.totalorder %s51, %s53
      %p60 = scmp.eq.s32.totalorder %s22, 1
      %p61 = por %p59, %p60
      %p62 = scmp.ne.s32.totalorder %s53, %s54
      %p63 = scmp.eq.s32.totalorder %s22, 0
      %p64 = por %p62, %p63
      %p65 = scmp.ne.s32.totalorder %s53, %s54
      %p66 = scmp.eq.s32.totalorder %s23, 1
      %p67 = por %p65, %p66
      %p69 = scmp.ne.s32.totalorder %s54, %s68
      %p70 = scmp.eq.s32.totalorder %s23, 0
      %p71 = por %p69, %p70
      %s73 = sadd.s32 %s72, 1
      %p76 = scmp.eq.s32.totalorder %s17, 1
      %p77 = scmp.ne.s32.totalorder %s72, %s74
      %p78 = scmp.eq.s32.totalorder %s17, 0
      %p79 = por %p77, %p78
      %p80 = scmp.ne.s32.totalorder %s72, %s74
      %p81 = scmp.eq.s32.totalorder %s22, 1
      %p82 = por %p80, %p81
      %p83 = scmp.ne.s32.totalorder %s74, %s75
      %p84 = scmp.eq.s32.totalorder %s22, 0
      %p85 = por %p83, %p84
      %p86 = scmp.ne.s32.totalorder %s74, %s75
      %p87 = scmp.eq.s32.totalorder %s23, 1
      %p88 = por %p86, %p87
      %p90 = scmp.ne.s32.totalorder %s75, %s89
      %p91 = scmp.eq.s32.totalorder %s23, 0
      %p92 = por %p90, %p91
      %s94 = sadd.s32 %s93, 1
      %p97 = scmp.eq.s32.totalorder %s17, 1
      %p98 = scmp.ne.s32.totalorder %s93, %s95
      %p99 = scmp.eq.s32.totalorder %s17, 0
      %p100 = por %p98, %p99
      %p101 = scmp.ne.s32.totalorder %s93, %s95
      %p102 = scmp.eq.s32.totalorder %s22, 1
      %p103 = por %p101, %p102
      %p104 = scmp.ne.s32.totalorder %s95, %s96
      %p105 = scmp.eq.s32.totalorder %s22, 0
      %p106 = por %p104, %p105
      %p107 = scmp.ne.s32.totalorder %s95, %s96
      %p108 = scmp.eq.s32.totalorder %s23, 1
      %p109 = por %p107, %p108
      %p111 = scmp.ne.s32.totalorder %s96, %s110
      %p112 = scmp.eq.s32.totalorder %s23, 0
      %p113 = por %p111, %p112
      %s115 = sadd.s32 %s114, 1
      %p118 = scmp.eq.s32.totalorder %s17, 1
      %p119 = scmp.ne.s32.totalorder %s114, %s116
      %p120 = scmp.eq.s32.totalorder %s17, 0
      %p121 = por %p119, %p120
      %p122 = scmp.ne.s32.totalorder %s114, %s116
      %p123 = scmp.eq.s32.totalorder %s22, 1
      %p124 = por %p122, %p123
      %p125 = scmp.ne.s32.totalorder %s116, %s117
      %p126 = scmp.eq.s32.totalorder %s22, 0
      %p127 = por %p125, %p126
      %p128 = scmp.ne.s32.totalorder %s116, %s117
      %p129 = scmp.eq.s32.totalorder %s23, 1
      %p130 = por %p128, %p129
      %p132 = scmp.ne.s32.totalorder %s117, %s131
      %p133 = scmp.eq.s32.totalorder %s23, 0
      %p134 = por %p132, %p133
      %s136 = sadd.s32 %s135, 1
      %p139 = scmp.eq.s32.totalorder %s17, 1
      %p140 = scmp.ne.s32.totalorder %s135, %s137
      %p141 = scmp.eq.s32.totalorder %s17, 0
      %p142 = por %p140, %p141
      %p143 = scmp.ne.s32.totalorder %s135, %s137
      %p144 = scmp.eq.s32.totalorder %s22, 1
      %p145 = por %p143, %p144
      %p146 = scmp.ne.s32.totalorder %s137, %s138
      %p147 = scmp.eq.s32.totalorder %s22, 0
      %p148 = por %p146, %p147
      %p149 = scmp.ne.s32.totalorder %s137, %s138
      %p150 = scmp.eq.s32.totalorder %s23, 1
      %p151 = por %p149, %p150
      %p153 = scmp.ne.s32.totalorder %s138, %s152
      %p154 = scmp.eq.s32.totalorder %s23, 0
      %p155 = por %p153, %p154
      %s157 = sadd.s32 %s156, 1
      %p160 = scmp.eq.s32.totalorder %s17, 1
      %p161 = scmp.ne.s32.totalorder %s156, %s158
      %p162 = scmp.eq.s32.totalorder %s17, 0
      %p163 = por %p161, %p162
      %p164 = scmp.ne.s32.totalorder %s156, %s158
      %p165 = scmp.eq.s32.totalorder %s22, 1
      %p166 = por %p164, %p165
      %p167 = scmp.ne.s32.totalorder %s158, %s159
      %p168 = scmp.eq.s32.totalorder %s22, 0
      %p169 = por %p167, %p168
      %p170 = scmp.ne.s32.totalorder %s158, %s159
      %p171 = scmp.eq.s32.totalorder %s23, 1
      %p172 = por %p170, %p171
      %p174 = scmp.ne.s32.totalorder %s159, %s173
      %p175 = scmp.eq.s32.totalorder %s23, 0
      %p176 = por %p174, %p175
      %s178 = sadd.s32 %s177, 1
      %p181 = scmp.eq.s32.totalorder %s17, 1
      %p182 = scmp.ne.s32.totalorder %s177, %s179
      %p183 = scmp.eq.s32.totalorder %s17, 0
      %p184 = por %p182, %p183
      %p185 = scmp.ne.s32.totalorder %s177, %s179
      %p186 = scmp.eq.s32.totalorder %s22, 1
      %p187 = por %p185, %p186
      %p188 = scmp.ne.s32.totalorder %s179, %s180
      %p189 = scmp.eq.s32.totalorder %s22, 0
      %p190 = por %p188, %p189
      %p191 = scmp.ne.s32.totalorder %s179, %s180
      %p192 = scmp.eq.s32.totalorder %s23, 1
      %p193 = por %p191, %p192
      %p195 = scmp.ne.s32.totalorder %s180, %s194
      %p196 = scmp.eq.s32.totalorder %s23, 0
      %p197 = por %p195, %p196
      %s198 = ssub.s32 %s17, %s24
      %p199 = scmp.eq.s32.totalorder %s198, 0
      %s201 = sadd.s32 %s200, 1
      %s202 = scalar_select %p199, %s200, %s201
      %p205 = pneg %p199
      %p206 = scmp.eq.s32.totalorder %s17, 1
      %p207 = por %p205, %p206
      %p208 = scmp.ne.s32.totalorder %s200, %s203
      %p209 = scmp.eq.s32.totalorder %s17, 0
      %p210 = por %p208, %p209
      %p211 = scmp.ne.s32.totalorder %s200, %s203
      %p212 = scmp.eq.s32.totalorder %s22, 1
      %p213 = por %p211, %p212
      %p214 = scmp.ne.s32.totalorder %s203, %s204
      %p215 = scmp.eq.s32.totalorder %s22, 0
      %p216 = por %p214, %p215
      %p217 = scmp.ne.s32.totalorder %s203, %s204
      %p218 = scmp.eq.s32.totalorder %s23, 1
      %p219 = por %p217, %p218
      %p221 = scmp.ne.s32.totalorder %s204, %s220
      %p222 = scmp.eq.s32.totalorder %s23, 0
      %p223 = por %p221, %p222
      %p224 = scmp.le.s32.totalorder 1, %s17
      %p225 = scmp.lt.s32.totalorder %s17, 3
      %p226 = pnand %p224, %p225
      %p227 = pneg %p226
      // Predicated region
      $region9: #{tpu_custom_call.1} parent=5 // pred_check
        _
      $region10: #{tpu_custom_call.1} parent=5 // pred_check_branch
        %229 = sbr.rel (%p226) target = $region12
      $region11: #{tpu_custom_call.1} parent=5 // pred_region
        %s230 = ssub.s32 %s17, 1
        // Predicated region
        $region13: #{tpu_custom_call.1} parent=11 // pred_check
          %p231 = pneg %p64
        $region14: #{tpu_custom_call.1} parent=11 // pred_check_branch
          %233 = sbr.rel (%p231) target = $region16
        $region15: #{tpu_custom_call.1} parent=11 // pred_region
          _
        $region16: #{tpu_custom_call.1} parent=11 // pred_fallthru
          _
        // Predicated region
        $region17: #{tpu_custom_call.1} parent=11 // pred_check
          %p234 = pneg %p85
        $region18: #{tpu_custom_call.1} parent=11 // pred_check_branch
          %236 = sbr.rel (%p234) target = $region20
        $region19: #{tpu_custom_call.1} parent=11 // pred_region
          _
        $region20: #{tpu_custom_call.1} parent=11 // pred_fallthru
          _
        // Predicated region
        $region21: #{tpu_custom_call.1} parent=11 // pred_check
          %p237 = pneg %p106
        $region22: #{tpu_custom_call.1} parent=11 // pred_check_branch
          %239 = sbr.rel (%p237) target = $region24
        $region23: #{tpu_custom_call.1} parent=11 // pred_region
          _
        $region24: #{tpu_custom_call.1} parent=11 // pred_fallthru
          _
        // Predicated region
        $region25: #{tpu_custom_call.1} parent=11 // pred_check
          %p240 = pneg %p127
        $region26: #{tpu_custom_call.1} parent=11 // pred_check_branch
          %242 = sbr.rel (%p240) target = $region28
        $region27: #{tpu_custom_call.1} parent=11 // pred_region
          _
        $region28: #{tpu_custom_call.1} parent=11 // pred_fallthru
          _
        // Predicated region
        $region29: #{tpu_custom_call.1} parent=11 // pred_check
          %p243 = pneg %p148
        $region30: #{tpu_custom_call.1} parent=11 // pred_check_branch
          %245 = sbr.rel (%p243) target = $region32
        $region31: #{tpu_custom_call.1} parent=11 // pred_region
          _
        $region32: #{tpu_custom_call.1} parent=11 // pred_fallthru
          _
        // Predicated region
        $region33: #{tpu_custom_call.1} parent=11 // pred_check
          %p246 = pneg %p169
        $region34: #{tpu_custom_call.1} parent=11 // pred_check_branch
          %248 = sbr.rel (%p246) target = $region36
        $region35: #{tpu_custom_call.1} parent=11 // pred_region
          _
        $region36: #{tpu_custom_call.1} parent=11 // pred_fallthru
          _
        // Predicated region
        $region37: #{tpu_custom_call.1} parent=11 // pred_check
          %p249 = pneg %p190
        $region38: #{tpu_custom_call.1} parent=11 // pred_check_branch
          %251 = sbr.rel (%p249) target = $region40
        $region39: #{tpu_custom_call.1} parent=11 // pred_region
          _
        $region40: #{tpu_custom_call.1} parent=11 // pred_fallthru
          _
      $region12: #{tpu_custom_call.1} parent=5 // pred_fallthru
        _
      %p252 = scmp.lt.s32.totalorder %s17, 2
      // Predicated region
      $region41: #{tpu_custom_call.1} parent=5 // pred_check
        %p253 = pneg %p252
      $region42: #{tpu_custom_call.1} parent=5 // pred_check_branch
        %255 = sbr.rel (%p253) target = $region44
      $region43: #{tpu_custom_call.1} parent=5 // pred_region
        // Predicated region
        $region45: #{tpu_custom_call.1} parent=43 // pred_check
          %p256 = pneg %p37
        $region46: #{tpu_custom_call.1} parent=43 // pred_check_branch
          %258 = sbr.rel (%p256) target = $region48
        $region47: #{tpu_custom_call.1} parent=43 // pred_region
          %p259 = scmp.lt.s32.totalorder %s17, 1
          %s260 = scalar_select %p259, %s17, 1
          %s261 = smul.addr %s260, 4
          %s262 = smul.addr %s261, 8
          %s263 = scalar_lea.vmem %s0, %s262
        $region48: #{tpu_custom_call.1} parent=43 // pred_fallthru
          _
      $region44: #{tpu_custom_call.1} parent=5 // pred_fallthru
        _
      %p264 = scmp.le.s32.totalorder 1, %s17
      %p265 = scmp.lt.s32.totalorder %s17, 3
      %p266 = pnand %p264, %p265
      %p267 = pneg %p266
      // Predicated region
      $region49: #{tpu_custom_call.1} parent=5 // pred_check
        _
      $region50: #{tpu_custom_call.1} parent=5 // pred_check_branch
        %269 = sbr.rel (%p266) target = $region52
      $region51: #{tpu_custom_call.1} parent=5 // pred_region
        %s270 = ssub.s32 %s17, 1
        %p271 = scmp.lt.s32.totalorder %s22, 1
        %s272 = scalar_select %p271, %s22, 1
        %s273 = smul.addr %s272, 4
        %s274 = smul.addr %s273, 8
        %s275 = scalar_lea.vmem %s0, %s274
        %p276 = pneg %p43
        %p277 = pneg %p40
        %p278 = pneg %p64
        %p279 = pneg %p61
        %p280 = pneg %p85
        %p281 = pneg %p82
        %p282 = pneg %p106
        %p283 = pneg %p103
        %p284 = pneg %p127
        %p285 = pneg %p124
        %p286 = pneg %p148
        %p287 = pneg %p145
        %p288 = pneg %p169
        %p289 = pneg %p166
        %p290 = pneg %p190
        %p291 = pneg %p187
        %p292 = pneg %p216
        %p293 = pneg %p213
        %s294 = sand.u32 %s203, 1
        %s295 = scalar_lea.sflag [#allocation3], %s294
        %s296 = sand.u32 %s203, 1
        %s297 = smul.addr %s296, 32
        %s298 = scalar_lea.vmem [#allocation2], %s297
        %p299 = scmp.lt.s32.totalorder %s22, 1
        %s300 = scalar_select %p299, %s22, 1
        %s301 = smul.addr %s300, 4
        %s302 = smul.addr %s301, 8
        %s303 = scalar_lea.vmem %s0, %s302
        %v304 = vld [vmem:[%s303] sm:$0xff]
        %v305 = vld [vmem:[%s303 + $0x8] sm:$0xff]
        %v306 = vld [vmem:[%s303 + $0x10] sm:$0xff]
        %v307 = vld [vmem:[%s303 + $0x18] sm:$0xff]
        %v308 = vld [vmem:[%s4] sm:$0xff]
        %v309 = vld [vmem:[%s4 + $0x8] sm:$0xff]
        %v310 = vld [vmem:[%s4 + $0x10] sm:$0xff]
        %v311 = vld [vmem:[%s4 + $0x18] sm:$0xff]
        %v312 = vld [vmem:[%s4 + $0x20] sm:$0xff]
        %v313 = vld [vmem:[%s4 + $0x28] sm:$0xff]
        %v314 = vld [vmem:[%s4 + $0x30] sm:$0xff]
        %v315 = vld [vmem:[%s4 + $0x38] sm:$0xff]
        %v316 = vld [vmem:[%s4 + $0x40] sm:$0xff]
        %v317 = vld [vmem:[%s4 + $0x48] sm:$0xff]
        %v318 = vld [vmem:[%s4 + $0x50] sm:$0xff]
        %v319 = vld [vmem:[%s4 + $0x58] sm:$0xff]
        %v320 = vld [vmem:[%s4 + $0x60] sm:$0xff]
        %v321 = vld [vmem:[%s4 + $0x68] sm:$0xff]
        %v322 = vld [vmem:[%s4 + $0x70] sm:$0xff]
        %v323 = vld [vmem:[%s4 + $0x78] sm:$0xff]
        %v324 = vld [vmem:[%s4 + $0x80] sm:$0xff]
        %v325 = vld [vmem:[%s4 + $0x88] sm:$0xff]
        %v326 = vld [vmem:[%s4 + $0x90] sm:$0xff]
        %v327 = vld [vmem:[%s4 + $0x98] sm:$0xff]
        %v328 = vld [vmem:[%s4 + $0xa0] sm:$0xff]
        %v329 = vld [vmem:[%s4 + $0xa8] sm:$0xff]
        %v330 = vld [vmem:[%s4 + $0xb0] sm:$0xff]
        %v331 = vld [vmem:[%s4 + $0xb8] sm:$0xff]
        %v332 = vld [vmem:[%s4 + $0xc0] sm:$0xff]
        %v333 = vld [vmem:[%s4 + $0xc8] sm:$0xff]
        %v334 = vld [vmem:[%s4 + $0xd0] sm:$0xff]
        %v335 = vld [vmem:[%s4 + $0xd8] sm:$0xff]
        %v336 = vld [vmem:[%s4 + $0xe0] sm:$0xff]
        %v337 = vld [vmem:[%s4 + $0xe8] sm:$0xff]
        %v338 = vld [vmem:[%s4 + $0xf0] sm:$0xff]
        %v339 = vld [vmem:[%s4 + $0xf8] sm:$0xff]
        %340 = vmatpush.msra.mxu0 %v323
        %341 = vmatpush.msra.mxu0 %v322
        %342 = vmatpush.msra.mxu0 %v321
        %343 = vmatpush.msra.mxu0 %v320
        %344 = vmatpush.msra.mxu0 %v319
        %345 = vmatpush.msra.mxu0 %v318
        %346 = vmatpush.msra.mxu0 %v317
        %347 = vmatpush.msra.mxu0 %v316
        %348 = vmatpush.msra.mxu0 %v315
        %349 = vmatpush.msra.mxu0 %v314
        %350 = vmatpush.msra.mxu0 %v313
        %351 = vmatpush.msra.mxu0 %v312
        %352 = vmatpush.msra.mxu0 %v311
        %353 = vmatpush.msra.mxu0 %v310
        %354 = vmatpush.msra.mxu0 %v309
        %355 = vmatpush.msra.mxu0 %v308
        %356 = vmatmul.f32.gmra.mxu0 %v304
        %v357 = vpop.f32.mrf.mxu0
        %v358 = vadd.f32 0.0, %v357
        %359 = vmatmul.f32.gmra.mxu0 %v306
        %v360 = vpop.f32.mrf.mxu0
        %v361 = vadd.f32 0.0, %v360
        %362 = vdwg.mxu0
        %363 = vmatpush.msra.mxu0 %v339
        %364 = vmatpush.msra.mxu0 %v338
        %365 = vmatpush.msra.mxu0 %v337
        %366 = vmatpush.msra.mxu0 %v336
        %367 = vmatpush.msra.mxu0 %v335
        %368 = vmatpush.msra.mxu0 %v334
        %369 = vmatpush.msra.mxu0 %v333
        %370 = vmatpush.msra.mxu0 %v332
        %371 = vmatpush.msra.mxu0 %v331
        %372 = vmatpush.msra.mxu0 %v330
        %373 = vmatpush.msra.mxu0 %v329
        %374 = vmatpush.msra.mxu0 %v328
        %375 = vmatpush.msra.mxu0 %v327
        %376 = vmatpush.msra.mxu0 %v326
        %377 = vmatpush.msra.mxu0 %v325
        %378 = vmatpush.msra.mxu0 %v324
        %379 = vmatmul.f32.gmra.mxu0 %v305
        %v380 = vpop.f32.mrf.mxu0
        %v381 = vadd.f32 %v358, %v380
        %382 = vmatmul.f32.gmra.mxu0 %v307
        %v383 = vpop.f32.mrf.mxu0
        %v384 = vadd.f32 %v361, %v383
        %385 = vdwg.mxu0
        %v386 = vld [vmem:[%s5] sm:$0xff]
        %v387 = vld [vmem:[%s5 + $0x8] sm:$0xff]
        %v388 = vld [vmem:[%s5 + $0x10] sm:$0xff]
        %v389 = vld [vmem:[%s5 + $0x18] sm:$0xff]
        %v390 = vld [vmem:[%s5 + $0x20] sm:$0xff]
        %v391 = vld [vmem:[%s5 + $0x28] sm:$0xff]
        %v392 = vld [vmem:[%s5 + $0x30] sm:$0xff]
        %v393 = vld [vmem:[%s5 + $0x38] sm:$0xff]
        %v394 = vld [vmem:[%s5 + $0x40] sm:$0xff]
        %v395 = vld [vmem:[%s5 + $0x48] sm:$0xff]
        %v396 = vld [vmem:[%s5 + $0x50] sm:$0xff]
        %v397 = vld [vmem:[%s5 + $0x58] sm:$0xff]
        %v398 = vld [vmem:[%s5 + $0x60] sm:$0xff]
        %v399 = vld [vmem:[%s5 + $0x68] sm:$0xff]
        %v400 = vld [vmem:[%s5 + $0x70] sm:$0xff]
        %v401 = vld [vmem:[%s5 + $0x78] sm:$0xff]
        %v402 = vld [vmem:[%s5 + $0x80] sm:$0xff]
        %v403 = vld [vmem:[%s5 + $0x88] sm:$0xff]
        %v404 = vld [vmem:[%s5 + $0x90] sm:$0xff]
        %v405 = vld [vmem:[%s5 + $0x98] sm:$0xff]
        %v406 = vld [vmem:[%s5 + $0xa0] sm:$0xff]
        %v407 = vld [vmem:[%s5 + $0xa8] sm:$0xff]
        %v408 = vld [vmem:[%s5 + $0xb0] sm:$0xff]
        %v409 = vld [vmem:[%s5 + $0xb8] sm:$0xff]
        %v410 = vld [vmem:[%s5 + $0xc0] sm:$0xff]
        %v411 = vld [vmem:[%s5 + $0xc8] sm:$0xff]
        %v412 = vld [vmem:[%s5 + $0xd0] sm:$0xff]
        %v413 = vld [vmem:[%s5 + $0xd8] sm:$0xff]
        %v414 = vld [vmem:[%s5 + $0xe0] sm:$0xff]
        %v415 = vld [vmem:[%s5 + $0xe8] sm:$0xff]
        %v416 = vld [vmem:[%s5 + $0xf0] sm:$0xff]
        %v417 = vld [vmem:[%s5 + $0xf8] sm:$0xff]
        %418 = vmatpush.msra.mxu0 %v401
        %419 = vmatpush.msra.mxu0 %v400
        %420 = vmatpush.msra.mxu0 %v399
        %421 = vmatpush.msra.mxu0 %v398
        %422 = vmatpush.msra.mxu0 %v397
        %423 = vmatpush.msra.mxu0 %v396
        %424 = vmatpush.msra.mxu0 %v395
        %425 = vmatpush.msra.mxu0 %v394
        %426 = vmatpush.msra.mxu0 %v393
        %427 = vmatpush.msra.mxu0 %v392
        %428 = vmatpush.msra.mxu0 %v391
        %429 = vmatpush.msra.mxu0 %v390
        %430 = vmatpush.msra.mxu0 %v389
        %431 = vmatpush.msra.mxu0 %v388
        %432 = vmatpush.msra.mxu0 %v387
        %433 = vmatpush.msra.mxu0 %v386
        %434 = vmatmul.f32.gmra.mxu0 %v304
        %v435 = vpop.f32.mrf.mxu0
        %v436 = vadd.f32 0.0, %v435
        %437 = vmatmul.f32.gmra.mxu0 %v306
        %v438 = vpop.f32.mrf.mxu0
        %v439 = vadd.f32 0.0, %v438
        %440 = vdwg.mxu0
        %441 = vmatpush.msra.mxu0 %v417
        %442 = vmatpush.msra.mxu0 %v416
        %443 = vmatpush.msra.mxu0 %v415
        %444 = vmatpush.msra.mxu0 %v414
        %445 = vmatpush.msra.mxu0 %v413
        %446 = vmatpush.msra.mxu0 %v412
        %447 = vmatpush.msra.mxu0 %v411
        %448 = vmatpush.msra.mxu0 %v410
        %449 = vmatpush.msra.mxu0 %v409
        %450 = vmatpush.msra.mxu0 %v408
        %451 = vmatpush.msra.mxu0 %v407
        %452 = vmatpush.msra.mxu0 %v406
        %453 = vmatpush.msra.mxu0 %v405
        %454 = vmatpush.msra.mxu0 %v404
        %455 = vmatpush.msra.mxu0 %v403
        %456 = vmatpush.msra.mxu0 %v402
        %457 = vmatmul.f32.gmra.mxu0 %v305
        %v458 = vpop.f32.mrf.mxu0
        %v459 = vadd.f32 %v436, %v458
        %460 = vmatmul.f32.gmra.mxu0 %v307
        %v461 = vpop.f32.mrf.mxu0
        %v462 = vadd.f32 %v439, %v461
        %463 = vdwg.mxu0
        %v464 = vld [vmem:[%s1] sm:$0xf]
        %vm465 = vcmask 130048
        %v467 = vsel %vm465, %v464, 0
        %469 = vmatpush.msra.mxu0 0.0
        %470 = vmatpush.msra.mxu0 0.0
        %471 = vmatpush.msra.mxu0 0.0
        %472 = vmatpush.msra.mxu0 0.0
        %473 = vmatpush.msra.mxu0 0.0
        %474 = vmatpush.msra.mxu0 0.0
        %475 = vmatpush.msra.mxu0 0.0
        %476 = vmatpush.msra.mxu0 0.0
        %477 = vmatpush.msra.mxu0 0.0
        %478 = vmatpush.msra.mxu0 0.0
        %479 = vmatpush.msra.mxu0 0.0
        %480 = vmatpush.msra.mxu0 0.0
        %481 = vmatpush.msra.mxu0 0.0
        %482 = vmatpush.msra.mxu0 0.0
        %483 = vmatpush.msra.mxu0 %v384
        %484 = vmatpush.msra.mxu0 %v381
        %485 = vmatmul.f32.gmra.mxu0 %v467
        %v486 = vpop.f32.mrf.mxu0
        %v487 = vadd.f32 0.0, %v486
        %488 = vdwg.mxu0
        %v489 = vmax.f32 %v487, 0.0
        %490 = vmatpush.msra.mxu0 0.0
        %491 = vmatpush.msra.mxu0 0.0
        %492 = vmatpush.msra.mxu0 0.0
        %493 = vmatpush.msra.mxu0 0.0
        %494 = vmatpush.msra.mxu0 0.0
        %495 = vmatpush.msra.mxu0 0.0
        %496 = vmatpush.msra.mxu0 0.0
        %497 = vmatpush.msra.mxu0 0.0
        %498 = vmatpush.msra.mxu0 0.0
        %499 = vmatpush.msra.mxu0 0.0
        %500 = vmatpush.msra.mxu0 0.0
        %501 = vmatpush.msra.mxu0 0.0
        %502 = vmatpush.msra.mxu0 0.0
        %503 = vmatpush.msra.mxu0 0.0
        %504 = vmatpush.msra.mxu0 %v462
        %505 = vmatpush.msra.mxu0 %v459
        %506 = vmatmul.f32.gmra.mxu0 %v467
        %v507 = vpop.f32.mrf.mxu0
        %v508 = vadd.f32 0.0, %v507
        %509 = vdwg.mxu0
        %v510 = vmax.f32 %v508, 0.0
        %v511 = vld [vmem:[%s2] sm:$0xff]
        %v512 = vld [vmem:[%s2 + $0x8] sm:$0xff]
        %vm513 = vcmask 31744
        %v515 = vsel %vm513, %v511, 0
        %v518 = vsel %vm513, %v512, 0
        %vm520 = vcmask 1043456
        %v522 = vsel %vm520, %v489, 0
        %524 = vmatpush.msra.mxu0 0.0
        %525 = vmatpush.msra.mxu0 0.0
        %526 = vmatpush.msra.mxu0 0.0
        %527 = vmatpush.msra.mxu0 0.0
        %528 = vmatpush.msra.mxu0 0.0
        %529 = vmatpush.msra.mxu0 0.0
        %530 = vmatpush.msra.mxu0 0.0
        %531 = vmatpush.msra.mxu0 0.0
        %532 = vmatpush.msra.mxu0 0.0
        %533 = vmatpush.msra.mxu0 0.0
        %534 = vmatpush.msra.mxu0 0.0
        %535 = vmatpush.msra.mxu0 0.0
        %536 = vmatpush.msra.mxu0 0.0
        %537 = vmatpush.msra.mxu0 0.0
        %538 = vmatpush.msra.mxu0 0.0
        %539 = vmatpush.msra.mxu0 %v522
        %540 = vmatmul.f32.gmra.mxu0 %v515
        %v541 = vpop.f32.mrf.mxu0
        %v542 = vadd.f32 0.0, %v541
        %543 = vmatmul.f32.gmra.mxu0 %v518
        %v544 = vpop.f32.mrf.mxu0
        %v545 = vadd.f32 0.0, %v544
        %546 = vdwg.mxu0
        %v547 = vsub.f32 0.0, %v542
        %v548 = vsub.f32 0.0, %v545
        %v549 = vmul.f32 %v547, 1.442695
        %v550 = vpow.pop %v549
        %v551 = vmul.f32 %v548, 1.442695
        %v552 = vpow.pop %v551
        %v553 = vadd.f32 %v550, 1.0
        %v554 = vadd.f32 %v552, 1.0
        %v555 = vrcp.pop %v553
        %v556 = vmul.f32 %v553, %v555
        %v557 = vsub.f32 1.0, %v556
        %v558 = vmul.f32 %v555, %v557
        %v559 = vadd.f32 %v555, %v558
        %vm560 = vweird.f32 %v553
        %vm561 = vweird.f32 %v555
        %vm562 = vmor %vm560, %vm561
        %v563 = vsel %vm562, %v555, %v559
        %v564 = vand.u32 2147483647, %v553
        %vm565 = vcmp.eq.f32.partialorder %v564, 8.507059e+37
        %v566 = vand.u32 %v553, 2147483648
        %v567 = vor.u32 1.1754944e-38, %v566
        %v568 = vsel %vm565, %v567, %v563
        %v569 = vmul.f32 1.0, %v568
        %v570 = vrcp.pop %v554
        %v571 = vmul.f32 %v554, %v570
        %v572 = vsub.f32 1.0, %v571
        %v573 = vmul.f32 %v570, %v572
        %v574 = vadd.f32 %v570, %v573
        %vm575 = vweird.f32 %v554
        %vm576 = vweird.f32 %v570
        %vm577 = vmor %vm575, %vm576
        %v578 = vsel %vm577, %v570, %v574
        %v579 = vand.u32 2147483647, %v554
        %vm580 = vcmp.eq.f32.partialorder %v579, 8.507059e+37
        %v581 = vand.u32 %v554, 2147483648
        %v582 = vor.u32 1.1754944e-38, %v581
        %v583 = vsel %vm580, %v582, %v578
        %v584 = vmul.f32 1.0, %v583
        %v585 = vld [vmem:[%s3] sm:$0xff]
        %v586 = vld [vmem:[%s3 + $0x8] sm:$0xff]
        %v588 = vsel %vm513, %v585, 0
        %v591 = vsel %vm513, %v586, 0
        %v594 = vsel %vm520, %v510, 0
        %596 = vmatpush.msra.mxu0 0.0
        %597 = vmatpush.msra.mxu0 0.0
        %598 = vmatpush.msra.mxu0 0.0
        %599 = vmatpush.msra.mxu0 0.0
        %600 = vmatpush.msra.mxu0 0.0
        %601 = vmatpush.msra.mxu0 0.0
        %602 = vmatpush.msra.mxu0 0.0
        %603 = vmatpush.msra.mxu0 0.0
        %604 = vmatpush.msra.mxu0 0.0
        %605 = vmatpush.msra.mxu0 0.0
        %606 = vmatpush.msra.mxu0 0.0
        %607 = vmatpush.msra.mxu0 0.0
        %608 = vmatpush.msra.mxu0 0.0
        %609 = vmatpush.msra.mxu0 0.0
        %610 = vmatpush.msra.mxu0 0.0
        %611 = vmatpush.msra.mxu0 %v594
        %612 = vmatmul.f32.gmra.mxu0 %v588
        %v613 = vpop.f32.mrf.mxu0
        %v614 = vadd.f32 0.0, %v613
        %615 = vmatmul.f32.gmra.mxu0 %v591
        %v616 = vpop.f32.mrf.mxu0
        %v617 = vadd.f32 0.0, %v616
        %618 = vdwg.mxu0
        %v619 = vsub.f32 0.0, %v614
        %v620 = vsub.f32 0.0, %v617
        %v621 = vmul.f32 %v619, 1.442695
        %v622 = vpow.pop %v621
        %v623 = vmul.f32 %v620, 1.442695
        %v624 = vpow.pop %v623
        %v625 = vadd.f32 %v622, 1.0
        %v626 = vadd.f32 %v624, 1.0
        %v627 = vrcp.pop %v625
        %v628 = vmul.f32 %v625, %v627
        %v629 = vsub.f32 1.0, %v628
        %v630 = vmul.f32 %v627, %v629
        %v631 = vadd.f32 %v627, %v630
        %vm632 = vweird.f32 %v625
        %vm633 = vweird.f32 %v627
        %vm634 = vmor %vm632, %vm633
        %v635 = vsel %vm634, %v627, %v631
        %v636 = vand.u32 2147483647, %v625
        %vm637 = vcmp.eq.f32.partialorder %v636, 8.507059e+37
        %v638 = vand.u32 %v625, 2147483648
        %v639 = vor.u32 1.1754944e-38, %v638
        %v640 = vsel %vm637, %v639, %v635
        %v641 = vmul.f32 1.0, %v640
        %v642 = vrcp.pop %v626
        %v643 = vmul.f32 %v626, %v642
        %v644 = vsub.f32 1.0, %v643
        %v645 = vmul.f32 %v642, %v644
        %v646 = vadd.f32 %v642, %v645
        %vm647 = vweird.f32 %v626
        %vm648 = vweird.f32 %v642
        %vm649 = vmor %vm647, %vm648
        %v650 = vsel %vm649, %v642, %v646
        %v651 = vand.u32 2147483647, %v626
        %vm652 = vcmp.eq.f32.partialorder %v651, 8.507059e+37
        %v653 = vand.u32 %v626, 2147483648
        %v654 = vor.u32 1.1754944e-38, %v653
        %v655 = vsel %vm652, %v654, %v650
        %v656 = vmul.f32 1.0, %v655
        %v657 = vld [vmem:[%s6] sm:$0xff]
        %v658 = vld [vmem:[%s6 + $0x8] sm:$0xff]
        %v659 = vld [vmem:[%s6 + $0x10] sm:$0xff]
        %v660 = vld [vmem:[%s6 + $0x18] sm:$0xff]
        %v662 = vsel %vm465, %v569, 0
        %v665 = vsel %vm465, %v584, 0
        %667 = vmatpush.msra.mxu0 0.0
        %668 = vmatpush.msra.mxu0 0.0
        %669 = vmatpush.msra.mxu0 0.0
        %670 = vmatpush.msra.mxu0 0.0
        %671 = vmatpush.msra.mxu0 0.0
        %672 = vmatpush.msra.mxu0 0.0
        %673 = vmatpush.msra.mxu0 0.0
        %674 = vmatpush.msra.mxu0 0.0
        %675 = vmatpush.msra.mxu0 0.0
        %676 = vmatpush.msra.mxu0 0.0
        %677 = vmatpush.msra.mxu0 0.0
        %678 = vmatpush.msra.mxu0 0.0
        %679 = vmatpush.msra.mxu0 0.0
        %680 = vmatpush.msra.mxu0 0.0
        %681 = vmatpush.msra.mxu0 %v659
        %682 = vmatpush.msra.mxu0 %v657
        %683 = vmatmul.f32.gmra.mxu0 %v662
        %v684 = vpop.f32.mrf.mxu0
        %v685 = vadd.f32 0.0, %v684
        %686 = vmatmul.f32.gmra.mxu0 %v665
        %v687 = vpop.f32.mrf.mxu0
        %v688 = vadd.f32 0.0, %v687
        %689 = vdwg.mxu0
        %690 = vmatpush.msra.mxu0 0.0
        %691 = vmatpush.msra.mxu0 0.0
        %692 = vmatpush.msra.mxu0 0.0
        %693 = vmatpush.msra.mxu0 0.0
        %694 = vmatpush.msra.mxu0 0.0
        %695 = vmatpush.msra.mxu0 0.0
        %696 = vmatpush.msra.mxu0 0.0
        %697 = vmatpush.msra.mxu0 0.0
        %698 = vmatpush.msra.mxu0 0.0
        %699 = vmatpush.msra.mxu0 0.0
        %700 = vmatpush.msra.mxu0 0.0
        %701 = vmatpush.msra.mxu0 0.0
        %702 = vmatpush.msra.mxu0 0.0
        %703 = vmatpush.msra.mxu0 0.0
        %704 = vmatpush.msra.mxu0 %v660
        %705 = vmatpush.msra.mxu0 %v658
        %706 = vmatmul.f32.gmra.mxu0 %v662
        %v707 = vpop.f32.mrf.mxu0
        %v708 = vadd.f32 0.0, %v707
        %709 = vmatmul.f32.gmra.mxu0 %v665
        %v710 = vpop.f32.mrf.mxu0
        %v711 = vadd.f32 0.0, %v710
        %712 = vdwg.mxu0
        %v713 = vld [vmem:[%s7] sm:$0xff]
        %v714 = vld [vmem:[%s7 + $0x8] sm:$0xff]
        %v715 = vld [vmem:[%s7 + $0x10] sm:$0xff]
        %v716 = vld [vmem:[%s7 + $0x18] sm:$0xff]
        %v718 = vsel %vm465, %v641, 0
        %v721 = vsel %vm465, %v656, 0
        %723 = vmatpush.msra.mxu0 0.0
        %724 = vmatpush.msra.mxu0 0.0
        %725 = vmatpush.msra.mxu0 0.0
        %726 = vmatpush.msra.mxu0 0.0
        %727 = vmatpush.msra.mxu0 0.0
        %728 = vmatpush.msra.mxu0 0.0
        %729 = vmatpush.msra.mxu0 0.0
        %730 = vmatpush.msra.mxu0 0.0
        %731 = vmatpush.msra.mxu0 0.0
        %732 = vmatpush.msra.mxu0 0.0
        %733 = vmatpush.msra.mxu0 0.0
        %734 = vmatpush.msra.mxu0 0.0
        %735 = vmatpush.msra.mxu0 0.0
        %736 = vmatpush.msra.mxu0 0.0
        %737 = vmatpush.msra.mxu0 %v715
        %738 = vmatpush.msra.mxu0 %v713
        %739 = vmatmul.f32.gmra.mxu0 %v718
        %v740 = vpop.f32.mrf.mxu0
        %v741 = vadd.f32 0.0, %v740
        %742 = vmatmul.f32.gmra.mxu0 %v721
        %v743 = vpop.f32.mrf.mxu0
        %v744 = vadd.f32 0.0, %v743
        %745 = vdwg.mxu0
        %746 = vmatpush.msra.mxu0 0.0
        %747 = vmatpush.msra.mxu0 0.0
        %748 = vmatpush.msra.mxu0 0.0
        %749 = vmatpush.msra.mxu0 0.0
        %750 = vmatpush.msra.mxu0 0.0
        %751 = vmatpush.msra.mxu0 0.0
        %752 = vmatpush.msra.mxu0 0.0
        %753 = vmatpush.msra.mxu0 0.0
        %754 = vmatpush.msra.mxu0 0.0
        %755 = vmatpush.msra.mxu0 0.0
        %756 = vmatpush.msra.mxu0 0.0
        %757 = vmatpush.msra.mxu0 0.0
        %758 = vmatpush.msra.mxu0 0.0
        %759 = vmatpush.msra.mxu0 0.0
        %760 = vmatpush.msra.mxu0 %v716
        %761 = vmatpush.msra.mxu0 %v714
        %762 = vmatmul.f32.gmra.mxu0 %v718
        %v763 = vpop.f32.mrf.mxu0
        %v764 = vadd.f32 0.0, %v763
        %765 = vmatmul.f32.gmra.mxu0 %v721
        %v766 = vpop.f32.mrf.mxu0
        %v767 = vadd.f32 0.0, %v766
        %768 = vdwg.mxu0
        %v769 = vmul.f32 %v685, %v741
        %v770 = vmul.f32 %v708, %v764
        %v771 = vmul.f32 %v688, %v744
        %v772 = vmul.f32 %v711, %v767
        %v773 = vadd.f32 %v769, 1.0
        %v774 = vadd.f32 %v770, 1.0
        %v775 = vadd.f32 %v771, 1.0
        %v776 = vadd.f32 %v772, 1.0
        %v777 = vmul.f32 %v304, %v773
        %v778 = vmul.f32 %v305, %v774
        %v779 = vmul.f32 %v306, %v775
        %v780 = vmul.f32 %v307, %v776
        %781 = vst [vmem:[%s298] sm:$0xff] %v777
        %782 = vst [vmem:[%s298 + $0x8] sm:$0xff] %v778
        %783 = vst [vmem:[%s298 + $0x10] sm:$0xff] %v779
        %784 = vst [vmem:[%s298 + $0x18] sm:$0xff] %v780
        %s785 = sand.u32 %s203, 1
        %s786 = scalar_lea.sflag [#allocation3], %s785
        %s787 = sand.u32 %s203, 1
        %s788 = smul.addr %s787, 32
        %s789 = scalar_lea.vmem [#allocation2], %s788
        // Predicated region
        $region53: #{tpu_custom_call.1} parent=51 // pred_check
          %p790 = pneg %p213
        $region54: #{tpu_custom_call.1} parent=51 // pred_check_branch
          %792 = sbr.rel (%p790) target = $region56
        $region55: #{tpu_custom_call.1} parent=51 // pred_region
          %794 = vsyncadd %s786, 0
          %s795 = smul.addr %s22, 4
          %s796 = smul.addr %s795, 8
          %s797 = scalar_lea.hbm %s8, %s796
          %s798 = sshll.u32 %s789, 4
          %s799 = int_to_ptr.vmem [resolvable:$true] %s798
          %s800 = sshll.u32 %s797, 4
          %s801 = int_to_ptr.hbm [resolvable:$true] %s800
          %806 = dma.vmem_to_hbm [thread:$0]  %s799, 512, %s801, %s786, 256, 256, 16
        $region56: #{tpu_custom_call.1} parent=51 // pred_fallthru
          _
      $region52: #{tpu_custom_call.1} parent=5 // pred_fallthru
        _
      %p807 = scmp.le.s32.totalorder 2, %s17
      // Predicated region
      $region57: #{tpu_custom_call.1} parent=5 // pred_check
        %p808 = pneg %p807
      $region58: #{tpu_custom_call.1} parent=5 // pred_check_branch
        %810 = sbr.rel (%p808) target = $region60
      $region59: #{tpu_custom_call.1} parent=5 // pred_region
        %s811 = ssub.s32 %s17, 2
        // Predicated region
        $region61: #{tpu_custom_call.1} parent=59 // pred_check
          %p812 = pneg %p219
        $region62: #{tpu_custom_call.1} parent=59 // pred_check_branch
          %814 = sbr.rel (%p812) target = $region64
        $region63: #{tpu_custom_call.1} parent=59 // pred_region
          %s815 = sand.u32 %s204, 1
          %s816 = scalar_lea.sflag [#allocation3], %s815
          %s817 = sand.u32 %s204, 1
          %s818 = smul.addr %s817, 32
          %s819 = scalar_lea.vmem [#allocation2], %s818
          %821 = dma.done %s816, 512
        $region64: #{tpu_custom_call.1} parent=59 // pred_fallthru
          _
      $region60: #{tpu_custom_call.1} parent=5 // pred_fallthru
        _
    $region6: #{tpu_custom_call.1} parent=1 // loop_footer
      %s21 = sadd.s32 1, %s17
    $region7: #{tpu_custom_call.1} parent=1 // loop_footer_branch
      %16 = sbr.rel target = $region3
    $region8: #{tpu_custom_call.1} parent=1 // loop_exit
      _
    %822 = vsyncpa [#allocation3], 1
    %s823 = scalar_lea.sflag [#allocation3], 1
    %824 = vsyncpa %s823, 1

</llo_original>
